<compile_context>
chip_gen: v7x
topology: tpu7x:2x2x1
jax: 0.10.0
libtpu: 0.0.40
codegen_flags: <defaults>
</compile_context>

<pallas_src>
import jax
import jax.numpy as jnp
from jax.experimental import pallas as pl
from jax.experimental.pallas import tpu as pltpu


def _dnc_write_head_kernel(vecs_ref, scal_ref, alloc_ref, mem_ref,
                           w_ref, newmem_ref):
    # vecs : (Bb, 3, M)  rows = [k, a, e]
    # scal : (Bb, 1, 3)  lanes = [beta, g_w, g_a]
    # alloc: (Bb, 1, N)
    # mem  : (Bb, N, M)
    vecs  = vecs_ref[...].astype(jnp.float32)
    scal  = scal_ref[...].astype(jnp.float32)
    alloc = alloc_ref[...].astype(jnp.float32)[:, 0, :]          # (Bb, N)
    mem   = mem_ref[...].astype(jnp.float32)                     # (Bb, N, M)

    k = vecs[:, 0, :]                                            # (Bb, M)
    a = vecs[:, 1, :]
    e = vecs[:, 2, :]
    beta = scal[:, :, 0]                                         # (Bb, 1)
    g_w  = scal[:, :, 1]
    g_a  = scal[:, :, 2]

    # --- content addressing: softmax_N(beta * cosine_sim(k, mem)) ---------
    # VPU multiply + lane-direction reductions; no MXU round-trips needed at
    # these shapes (K would be 1 or M with a single output row).
    dot = jnp.sum(k[:, None, :] * mem, axis=-1)                  # (Bb, N)
    ksq = jnp.sum(k * k, axis=-1, keepdims=True)                 # (Bb, 1)
    msq = jnp.sum(mem * mem, axis=-1)                            # (Bb, N)
    sim = dot / (jnp.sqrt(ksq) * jnp.sqrt(msq) + 1e-16)

    scores = beta * sim
    scores = scores - jnp.max(scores, axis=-1, keepdims=True)
    p = jnp.exp(scores)
    c = p / jnp.sum(p, axis=-1, keepdims=True)                   # (Bb, N)

    # --- gated write weighting --------------------------------------------
    W = g_w * (g_a * alloc + (1.0 - g_a) * c)                    # (Bb, N)
    w_ref[...] = W[:, None, :].astype(w_ref.dtype)               # (Bb, 1, N)

    # --- memory write: mem' = mem*(1 - W^T e) + W^T a (VPU broadcast) ------
    Wc = W[:, :, None]                                           # (Bb, N, 1)
    newmem_ref[...] = (mem * (1.0 - Wc * e[:, None, :])
                       + Wc * a[:, None, :]).astype(newmem_ref.dtype)


def _choose_b_blk(B, N, M, itemsize, vmem_budget_bytes):
    """Largest divisor of B such that double-buffered mem in/out fits budget."""
    per_b = 4 * N * M * itemsize + 4 * (4 * M + N + 4) * 4
    b_blk = max(1, min(B, vmem_budget_bytes // max(per_b, 1)))
    while B % b_blk != 0:
        b_blk -= 1
    return b_blk


def dnc_write_head_forward(head_parameters, head_no, memory, *,
                           b_blk=None, vmem_budget_bytes=12 << 20):
    """Pallas equivalent of DNC_write_head.forward. Returns (W, new_memory)."""
    k     = head_parameters['write_keys'][:, head_no, :]          # (B, M)
    beta  = head_parameters['write_strengths'][:, head_no]        # (B,)
    g_w   = head_parameters['write_gate'][:, head_no]             # (B,)
    g_a   = head_parameters['allocation_gate'][:, head_no]        # (B,)
    a     = head_parameters['write_vectors'][:, head_no, :]       # (B, M)
    e     = head_parameters['erase_vectors'][:, head_no, :]       # (B, M)
    alloc = head_parameters['alloc_weights'][head_no]             # (B, N)

    B, N, M = memory.shape
    f32 = jnp.float32

    # Pack the small per-batch operands so each grid step issues few DMAs.
    vecs   = jnp.stack([k, a, e], axis=1).astype(f32)                    # (B, 3, M)
    scals  = jnp.stack([beta, g_w, g_a], axis=1).astype(f32)[:, None, :]  # (B, 1, 3)
    alloc3 = alloc.astype(f32)[:, None, :]                               # (B, 1, N)

    if b_blk is None:
        # 12 MiB default keeps us under the scoped-VMEM defaults on v5e (16 MiB),
        # v6e (32 MiB) and v7x (32 MiB) without touching vmem_limit_bytes.
        b_blk = _choose_b_blk(B, N, M, jnp.dtype(memory.dtype).itemsize,
                              vmem_budget_bytes)
    grid = (B // b_blk,)

    def blk3(d1, d2):
        return pl.BlockSpec((b_blk, d1, d2), lambda b: (b, 0, 0))

    W3, new_mem = pl.pallas_call(
        _dnc_write_head_kernel,
        out_shape=(jax.ShapeDtypeStruct((B, 1, N), f32),       # W kept in f32
                   jax.ShapeDtypeStruct((B, N, M), memory.dtype)),
        grid_spec=pltpu.PrefetchScalarGridSpec(
            num_scalar_prefetch=0,
            grid=grid,
            in_specs=[blk3(3, M),     # packed k / a / e
                      blk3(1, 3),     # packed beta / g_w / g_a
                      blk3(1, N),     # alloc weights
                      blk3(N, M)],    # memory
            out_specs=[blk3(1, N),    # W
                       blk3(N, M)],   # new memory
        ),
        # DNC writes memory in place: alias memory input (arg 3) to new_mem (out 1).
        input_output_aliases={3: 1},
        compiler_params=pltpu.CompilerParams(
            dimension_semantics=("parallel",)),
    )(vecs, scals, alloc3, memory)
    return W3[:, 0, :], new_mem


def _reference(head_parameters, head_no, memory):
    """Pure-JAX reference of the same DNC write-head semantics."""
    k     = head_parameters['write_keys'][:, head_no, :]
    beta  = head_parameters['write_strengths'][:, head_no][:, None]
    g_w   = head_parameters['write_gate'][:, head_no][:, None]
    g_a   = head_parameters['allocation_gate'][:, head_no][:, None]
    a     = head_parameters['write_vectors'][:, head_no, :]
    e     = head_parameters['erase_vectors'][:, head_no, :]
    alloc = head_parameters['alloc_weights'][head_no]

    dot = jnp.einsum('bm,bnm->bn', k, memory)
    denom = (jnp.linalg.norm(k, axis=-1, keepdims=True)
             * jnp.linalg.norm(memory, axis=-1) + 1e-16)
    c = jax.nn.softmax(beta * dot / denom, axis=-1)
    W = g_w * (g_a * alloc + (1.0 - g_a) * c)
    new_mem = (memory * (1.0 - W[..., None] * e[:, None, :])
               + W[..., None] * a[:, None, :])
    return W, new_mem


if __name__ == "__main__":
    B, H, N, M = 2, 2, 16, 32   # batch, write heads, memory slots, word size
    head_no = 0

    key = jax.random.PRNGKey(0)
    ks = jax.random.split(key, 8)
    head_parameters = {
        'write_keys':      jnp.tanh(jax.random.normal(ks[0], (B, H, M), jnp.float32)),
        'write_strengths': 1.0 + jax.nn.softplus(jax.random.normal(ks[1], (B, H), jnp.float32)),
        'write_gate':      jax.nn.sigmoid(jax.random.normal(ks[2], (B, H), jnp.float32)),
        'allocation_gate': jax.nn.sigmoid(jax.random.normal(ks[3], (B, H), jnp.float32)),
        'write_vectors':   jax.random.normal(ks[4], (B, H, M), jnp.float32),
        'erase_vectors':   jax.nn.sigmoid(jax.random.normal(ks[5], (B, H, M), jnp.float32)),
        'alloc_weights':   jax.nn.softmax(jax.random.normal(ks[6], (H, B, N), jnp.float32), axis=-1),
    }
    memory = 0.1 * jax.random.normal(ks[7], (B, N, M), jnp.float32)

    W, new_mem = dnc_write_head_forward(head_parameters, head_no, memory)
    jax.block_until_ready((W, new_mem))

    W_ref, new_mem_ref = _reference(head_parameters, head_no, memory)
    assert jnp.allclose(W, W_ref, atol=1e-5, rtol=1e-5), "write weights mismatch"
    assert jnp.allclose(new_mem, new_mem_ref, atol=1e-5, rtol=1e-5), "memory mismatch"

    print("KERNEL_OK")
</pallas_src>

<mosaic_0001>
module attributes {stable_mosaic.version = 11 : i64} {
  func.func @_dnc_write_head_kernel(%arg0: i32, %arg1: memref<2x3x32xf32, #tpu.memory_space<vmem>>, %arg2: memref<2x1x3xf32, #tpu.memory_space<vmem>>, %arg3: memref<2x1x16xf32, #tpu.memory_space<vmem>>, %arg4: memref<2x16x32xf32, #tpu.memory_space<vmem>>, %arg5: memref<2x1x16xf32, #tpu.memory_space<vmem>>, %arg6: memref<2x16x32xf32, #tpu.memory_space<vmem>>) attributes {dimension_semantics = [#tpu.dimension_semantics<parallel>], iteration_bounds = array<i64: 1>, scalar_prefetch = 0 : i64, scratch_operands = 0 : i64, tpu.core_type = #tpu.core_type<tc>, window_params = [{transform_indices = @transform_0, window_bounds = array<i64: 2, 3, 32>}, {transform_indices = @transform_1, window_bounds = array<i64: 2, 1, 3>}, {transform_indices = @transform_2, window_bounds = array<i64: 2, 1, 16>}, {transform_indices = @transform_3, window_bounds = array<i64: 2, 16, 32>}, {transform_indices = @transform_4, window_bounds = array<i64: 2, 1, 16>}, {transform_indices = @transform_5, window_bounds = array<i64: 2, 16, 32>}]} {
    %c0 = arith.constant 0 : index
    %c0_0 = arith.constant 0 : index
    %c0_1 = arith.constant 0 : index
    %0 = vector.load %arg1[%c0, %c0_0, %c0_1] : memref<2x3x32xf32, #tpu.memory_space<vmem>>, vector<2x3x32xf32>
    %c0_2 = arith.constant 0 : index
    %c0_3 = arith.constant 0 : index
    %c0_4 = arith.constant 0 : index
    %1 = vector.load %arg2[%c0_2, %c0_3, %c0_4] : memref<2x1x3xf32, #tpu.memory_space<vmem>>, vector<2x1x3xf32>
    %c0_5 = arith.constant 0 : index
    %c0_6 = arith.constant 0 : index
    %c0_7 = arith.constant 0 : index
    %2 = vector.load %arg3[%c0_5, %c0_6, %c0_7] : memref<2x1x16xf32, #tpu.memory_space<vmem>>, vector<2x1x16xf32>
    %3 = vector.shape_cast %2 : vector<2x1x16xf32> to vector<2x16xf32>
    %c0_8 = arith.constant 0 : index
    %c0_9 = arith.constant 0 : index
    %c0_10 = arith.constant 0 : index
    %4 = vector.load %arg4[%c0_8, %c0_9, %c0_10] : memref<2x16x32xf32, #tpu.memory_space<vmem>>, vector<2x16x32xf32>
    %5 = vector.extract_strided_slice %0 {offsets = [0, 0, 0], sizes = [2, 1, 32], strides = [1, 1, 1]} : vector<2x3x32xf32> to vector<2x1x32xf32>
    %6 = vector.shape_cast %5 : vector<2x1x32xf32> to vector<2x32xf32>
    %7 = vector.extract_strided_slice %0 {offsets = [0, 1, 0], sizes = [2, 1, 32], strides = [1, 1, 1]} : vector<2x3x32xf32> to vector<2x1x32xf32>
    %8 = vector.shape_cast %7 : vector<2x1x32xf32> to vector<2x32xf32>
    %9 = vector.extract_strided_slice %0 {offsets = [0, 2, 0], sizes = [2, 1, 32], strides = [1, 1, 1]} : vector<2x3x32xf32> to vector<2x1x32xf32>
    %10 = vector.shape_cast %9 : vector<2x1x32xf32> to vector<2x32xf32>
    %11 = vector.extract_strided_slice %1 {offsets = [0, 0, 0], sizes = [2, 1, 1], strides = [1, 1, 1]} : vector<2x1x3xf32> to vector<2x1x1xf32>
    %12 = vector.shape_cast %11 : vector<2x1x1xf32> to vector<2x1xf32>
    %13 = vector.extract_strided_slice %1 {offsets = [0, 0, 1], sizes = [2, 1, 1], strides = [1, 1, 1]} : vector<2x1x3xf32> to vector<2x1x1xf32>
    %14 = vector.shape_cast %13 : vector<2x1x1xf32> to vector<2x1xf32>
    %15 = vector.extract_strided_slice %1 {offsets = [0, 0, 2], sizes = [2, 1, 1], strides = [1, 1, 1]} : vector<2x1x3xf32> to vector<2x1x1xf32>
    %16 = vector.shape_cast %15 : vector<2x1x1xf32> to vector<2x1xf32>
    %17 = vector.shape_cast %6 : vector<2x32xf32> to vector<2x1x32xf32>
    %18 = vector.broadcast %17 : vector<2x1x32xf32> to vector<2x16x32xf32>
    %19 = arith.mulf %18, %4 : vector<2x16x32xf32>
    %cst = arith.constant dense<0.000000e+00> : vector<2x16xf32>
    %20 = vector.multi_reduction <add>, %19, %cst [2] : vector<2x16x32xf32> to vector<2x16xf32>
    %21 = arith.mulf %6, %6 : vector<2x32xf32>
    %cst_11 = arith.constant dense<0.000000e+00> : vector<2xf32>
    %22 = vector.multi_reduction <add>, %21, %cst_11 [1] : vector<2x32xf32> to vector<2xf32>
    %23 = vector.shape_cast %22 : vector<2xf32> to vector<2x1xf32>
    %24 = arith.mulf %4, %4 : vector<2x16x32xf32>
    %cst_12 = arith.constant dense<0.000000e+00> : vector<2x16xf32>
    %25 = vector.multi_reduction <add>, %24, %cst_12 [2] : vector<2x16x32xf32> to vector<2x16xf32>
    %26 = math.sqrt %23 : vector<2x1xf32>
    %27 = math.sqrt %25 : vector<2x16xf32>
    %28 = vector.broadcast %26 : vector<2x1xf32> to vector<2x16xf32>
    %29 = arith.mulf %28, %27 : vector<2x16xf32>
    %cst_13 = arith.constant 1.000000e-16 : f32
    %30 = vector.broadcast %cst_13 : f32 to vector<2x16xf32>
    %31 = arith.addf %29, %30 : vector<2x16xf32>
    %32 = arith.divf %20, %31 : vector<2x16xf32>
    %33 = vector.broadcast %12 : vector<2x1xf32> to vector<2x16xf32>
    %34 = arith.mulf %33, %32 : vector<2x16xf32>
    %cst_14 = arith.constant dense<0xFF800000> : vector<2xf32>
    %35 = vector.multi_reduction <maximumf>, %34, %cst_14 [1] : vector<2x16xf32> to vector<2xf32>
    %36 = vector.shape_cast %35 : vector<2xf32> to vector<2x1xf32>
    %37 = vector.broadcast %36 : vector<2x1xf32> to vector<2x16xf32>
    %38 = arith.subf %34, %37 : vector<2x16xf32>
    %39 = math.exp %38 : vector<2x16xf32>
    %cst_15 = arith.constant dense<0.000000e+00> : vector<2xf32>
    %40 = vector.multi_reduction <add>, %39, %cst_15 [1] : vector<2x16xf32> to vector<2xf32>
    %41 = vector.shape_cast %40 : vector<2xf32> to vector<2x1xf32>
    %42 = vector.broadcast %41 : vector<2x1xf32> to vector<2x16xf32>
    %43 = arith.divf %39, %42 : vector<2x16xf32>
    %44 = vector.broadcast %16 : vector<2x1xf32> to vector<2x16xf32>
    %45 = arith.mulf %44, %3 : vector<2x16xf32>
    %cst_16 = arith.constant 1.000000e+00 : f32
    %46 = vector.broadcast %cst_16 : f32 to vector<2x1xf32>
    %47 = arith.subf %46, %16 : vector<2x1xf32>
    %48 = vector.broadcast %47 : vector<2x1xf32> to vector<2x16xf32>
    %49 = arith.mulf %48, %43 : vector<2x16xf32>
    %50 = arith.addf %45, %49 : vector<2x16xf32>
    %51 = vector.broadcast %14 : vector<2x1xf32> to vector<2x16xf32>
    %52 = arith.mulf %51, %50 : vector<2x16xf32>
    %53 = vector.shape_cast %52 : vector<2x16xf32> to vector<2x1x16xf32>
    %c0_17 = arith.constant 0 : index
    %c0_18 = arith.constant 0 : index
    %c0_19 = arith.constant 0 : index
    %54 = vector.load %arg5[%c0_17, %c0_18, %c0_19] : memref<2x1x16xf32, #tpu.memory_space<vmem>>, vector<2x1x16xf32>
    tpu.vector_store %arg5[%c0_17, %c0_18, %c0_19], %53 {strides = array<i32>} : memref<2x1x16xf32, #tpu.memory_space<vmem>>, vector<2x1x16xf32>,
    %55 = vector.shape_cast %52 : vector<2x16xf32> to vector<2x16x1xf32>
    %56 = vector.shape_cast %10 : vector<2x32xf32> to vector<2x1x32xf32>
    %57 = vector.broadcast %55 : vector<2x16x1xf32> to vector<2x16x32xf32>
    %58 = vector.broadcast %56 : vector<2x1x32xf32> to vector<2x16x32xf32>
    %59 = arith.mulf %57, %58 : vector<2x16x32xf32>
    %cst_20 = arith.constant 1.000000e+00 : f32
    %60 = vector.broadcast %cst_20 : f32 to vector<2x16x32xf32>
    %61 = arith.subf %60, %59 : vector<2x16x32xf32>
    %62 = arith.mulf %4, %61 : vector<2x16x32xf32>
    %63 = vector.shape_cast %8 : vector<2x32xf32> to vector<2x1x32xf32>
    %64 = vector.broadcast %55 : vector<2x16x1xf32> to vector<2x16x32xf32>
    %65 = vector.broadcast %63 : vector<2x1x32xf32> to vector<2x16x32xf32>
    %66 = arith.mulf %64, %65 : vector<2x16x32xf32>
    %67 = arith.addf %62, %66 : vector<2x16x32xf32>
    %c0_21 = arith.constant 0 : index
    %c0_22 = arith.constant 0 : index
    %c0_23 = arith.constant 0 : index
    %68 = vector.load %arg6[%c0_21, %c0_22, %c0_23] : memref<2x16x32xf32, #tpu.memory_space<vmem>>, vector<2x16x32xf32>
    tpu.vector_store %arg6[%c0_21, %c0_22, %c0_23], %67 {strides = array<i32>} : memref<2x16x32xf32, #tpu.memory_space<vmem>>, vector<2x16x32xf32>,
    return
  }
  func.func @transform_0(%arg0: i32) -> (i32, i32, i32) {
    %c0_i32 = arith.constant 0 : i32
    %c0_i32_0 = arith.constant 0 : i32
    %c0_i32_1 = arith.constant 0 : i32
    return %arg0, %c0_i32, %c0_i32_0 : i32, i32, i32
  }
  func.func @transform_1(%arg0: i32) -> (i32, i32, i32) {
    %c0_i32 = arith.constant 0 : i32
    %c0_i32_0 = arith.constant 0 : i32
    %c0_i32_1 = arith.constant 0 : i32
    return %arg0, %c0_i32, %c0_i32_0 : i32, i32, i32
  }
  func.func @transform_2(%arg0: i32) -> (i32, i32, i32) {
    %c0_i32 = arith.constant 0 : i32
    %c0_i32_0 = arith.constant 0 : i32
    %c0_i32_1 = arith.constant 0 : i32
    return %arg0, %c0_i32, %c0_i32_0 : i32, i32, i32
  }
  func.func @transform_3(%arg0: i32) -> (i32, i32, i32) {
    %c0_i32 = arith.constant 0 : i32
    %c0_i32_0 = arith.constant 0 : i32
    %c0_i32_1 = arith.constant 0 : i32
    return %arg0, %c0_i32, %c0_i32_0 : i32, i32, i32
  }
  func.func @transform_4(%arg0: i32) -> (i32, i32, i32) {
    %c0_i32 = arith.constant 0 : i32
    %c0_i32_0 = arith.constant 0 : i32
    %c0_i32_1 = arith.constant 0 : i32
    return %arg0, %c0_i32, %c0_i32_0 : i32, i32, i32
  }
  func.func @transform_5(%arg0: i32) -> (i32, i32, i32) {
    %c0_i32 = arith.constant 0 : i32
    %c0_i32_0 = arith.constant 0 : i32
    %c0_i32_1 = arith.constant 0 : i32
    return %arg0, %c0_i32, %c0_i32_0 : i32, i32, i32
  }
}

</mosaic_0001>

<llo_original>
// kernel: tpu_custom_call.1
$region0: #{tpu_custom_call.1}
  #allocation0 [shape = 'u32[]', space=smem, size = 0x4, offset = 0x4, fixed_abs, tag = 'smem constant byte address 0x4 - core index']
  #allocation1 [shape = 'u32[144,128]{1,0:T(1,128)}', space=vmem, size = 0x12000, scoped, tag = 'internal scratch']
  %s0 = inlined_call_operand.vmem [shape: f32[2,3,32], index: 0, kind: input, shape index: {}]
  %s1 = inlined_call_operand.vmem [shape: f32[2,1,3], index: 1, kind: input, shape index: {}]
  %s2 = inlined_call_operand.vmem [shape: f32[2,1,16], index: 2, kind: input, shape index: {}]
  %s3 = inlined_call_operand.hbm [shape: f32[2,16,32], index: 3, kind: input, shape index: {}, may-alias: {3,5}]
  %s4 = inlined_call_operand.hbm [shape: f32[2,1,16], index: 4, kind: output, shape index: {0}]
  %s5 = inlined_call_operand.hbm [shape: f32[2,16,32], index: 5, kind: output, shape index: {1}, may-alias: {3,5}]
  %6 = xla_tuple %s4, %s5
  %s7 = sld [smem:[#allocation0]]
  $region38: #{tpu_custom_call.1} parent=0
    _
  %s9 = ssub.s32 1, %s7
  %s10 = scalar_select 0, %s9, %s7
  $region1: #{tpu_custom_call.1} parent=0
    #allocation2 [shape = 'u8[16384]{0}', space=vmem, size = 0x4000, scoped, tag = 'input window, operand 3, single buffered']
    #allocation3 [shape = 's32[1]{0}', space=sflag, size = 0x4, scoped, tag = 'scoped memory for tpu_custom_call.1']
    #allocation4 [shape = 's32[1]{0}', space=sflag, size = 0x4, scoped, tag = 'scoped memory for tpu_custom_call.1']
    #allocation5 [shape = 'u8[1024]{0}', space=vmem, size = 0x400, scoped, tag = 'output window, operand 0, single buffered']
    #allocation6 [shape = 'u8[16384]{0}', space=vmem, size = 0x4000, scoped, tag = 'output window, operand 1, single buffered']
    #allocation7 [shape = 's32[1]{0}', space=sflag, size = 0x4, scoped, tag = 'scoped memory for tpu_custom_call.1']
    %11 = vsyncpa [#allocation3], 0
    %12 = vsyncpa [#allocation4], 0
    %13 = vsyncpa [#allocation7], 0
    // Predicated region
    $region2: #{tpu_custom_call.1} parent=1 // pred_check
      _
    $region3: #{tpu_custom_call.1} parent=1 // pred_check_branch
      %15 = sbr.rel (0) target = $region5
    $region4: #{tpu_custom_call.1} parent=1 // pred_region
      _
    $region5: #{tpu_custom_call.1} parent=1 // pred_fallthru
      _
    // Predicated region
    $region6: #{tpu_custom_call.1} parent=1 // pred_check
      _
    $region7: #{tpu_custom_call.1} parent=1 // pred_check_branch
      %17 = sbr.rel (0) target = $region9
    $region8: #{tpu_custom_call.1} parent=1 // pred_region
      _
    $region9: #{tpu_custom_call.1} parent=1 // pred_fallthru
      _
    // Predicated region
    $region10: #{tpu_custom_call.1} parent=1 // pred_check
      _
    $region11: #{tpu_custom_call.1} parent=1 // pred_check_branch
      %19 = sbr.rel (0) target = $region13
    $region12: #{tpu_custom_call.1} parent=1 // pred_region
      _
    $region13: #{tpu_custom_call.1} parent=1 // pred_fallthru
      _
    // Predicated region
    $region14: #{tpu_custom_call.1} parent=1 // pred_check
      _
    $region15: #{tpu_custom_call.1} parent=1 // pred_check_branch
      %21 = sbr.rel (0) target = $region17
    $region16: #{tpu_custom_call.1} parent=1 // pred_region
      %s23 = ssub.s32 512, 512
      %24 = vsyncadd [#allocation3], %s23
      %s25 = sshll.u32 [#allocation2], 4
      %s26 = int_to_ptr.vmem [resolvable:$true] %s25
      %31 = dma.hbm_to_vmem [thread:$0]  %s3, 512, %s26, [#allocation3], 128, 128, 8
    $region17: #{tpu_custom_call.1} parent=1 // pred_fallthru
      _
    // Predicated region
    $region18: #{tpu_custom_call.1} parent=1 // pred_check
      _
    $region19: #{tpu_custom_call.1} parent=1 // pred_check_branch
      %33 = sbr.rel (0) target = $region21
    $region20: #{tpu_custom_call.1} parent=1 // pred_region
      %34 = dma.done [#allocation3], 512
    $region21: #{tpu_custom_call.1} parent=1 // pred_fallthru
      _
    %v35 = vld [vmem:[%s0] sm:$0x7]
    %v36 = vld [vmem:[%s0 + $0x4] sm:$0x7]
    %v37 = vld [vmem:[%s1] sm:$0x1]
    %v38 = vld [vmem:[%s1 + $0x1] sm:$0x1]
    %v39 = vld [vmem:[%s2] sm:$0x1]
    %v40 = vld [vmem:[%s2 + $0x1] sm:$0x1]
    %v41 = vld [vmem:[#allocation2] sm:$0xff]
    %v42 = vld [vmem:[#allocation2 + $0x8] sm:$0xff]
    %v43 = vld [vmem:[#allocation2 + $0x10] sm:$0xff]
    %v44 = vld [vmem:[#allocation2 + $0x18] sm:$0xff]
    %v45 = vlaneseq
    %v46 = vshrl.u32 %v45, 7
    %v47 = vsub.s32 0, %v46
    %v48 = vrot.slane %v35, %v47
    %v49 = vlaneseq
    %v50 = vshrl.u32 %v49, 7
    %v51 = vsub.s32 0, %v50
    %v52 = vrot.slane %v36, %v51
    %v53 = vmul.f32 %v48, %v41
    %v54 = vmul.f32 %v48, %v42
    %v55 = vmul.f32 %v52, %v43
    %v56 = vmul.f32 %v52, %v44
    %vm57 = vcmask 261120
    %v58 = vsel %vm57, %v53, 0.0
    %59 = vadd.xlane.f32.xlu0 %v58
    %v60 = vpop.xlane.xlu0 %59
    %v61 = vsel %vm57, %v54, 0.0
    %62 = vadd.xlane.f32.xlu0 %v61
    %v63 = vpop.xlane.xlu0 %62
    %v64 = vsel %vm57, %v55, 0.0
    %65 = vadd.xlane.f32.xlu0 %v64
    %v66 = vpop.xlane.xlu0 %65
    %v67 = vsel %vm57, %v56, 0.0
    %68 = vadd.xlane.f32.xlu0 %v67
    %v69 = vpop.xlane.xlu0 %68
    %v70 = vmul.f32 %v35, %v35
    %v71 = vmul.f32 %v36, %v36
    %v74 = vrot.slane %v71, 7
    %vm75 = vcmask 1041409
    %v76 = vsel %vm75, %v74, %v70
    %vm78 = vcmask 254976
    %v79 = vsel %vm78, %v76, 0.0
    %80 = vadd.xlane.f32.xlu0 %v79
    %v81 = vpop.xlane.xlu0 %80
    %v82 = vmul.f32 %v41, %v41
    %v83 = vmul.f32 %v42, %v42
    %v84 = vmul.f32 %v43, %v43
    %v85 = vmul.f32 %v44, %v44
    %v86 = vsel %vm57, %v82, 0.0
    %87 = vadd.xlane.f32.xlu0 %v86
    %v88 = vpop.xlane.xlu0 %87
    %v89 = vsel %vm57, %v83, 0.0
    %90 = vadd.xlane.f32.xlu0 %v89
    %v91 = vpop.xlane.xlu0 %90
    %v92 = vsel %vm57, %v84, 0.0
    %93 = vadd.xlane.f32.xlu0 %v92
    %v94 = vpop.xlane.xlu0 %93
    %v95 = vsel %vm57, %v85, 0.0
    %96 = vadd.xlane.f32.xlu0 %v95
    %v97 = vpop.xlane.xlu0 %96
    %v98 = vrsqrt.pop %v81
    %v99 = vmul.f32 %v81, %v98
    %vm100 = vcmp.eq.f32.partialorder %v81, inf
    %v101 = vsel %vm100, %v81, %v99
    %vm102 = vcmp.eq.f32.partialorder %v81, 0.0
    %v103 = vand.u32 %v81, 2147483648
    %v104 = vsel %vm102, %v103, %v101
    %v105 = vrsqrt.pop %v88
    %v106 = vmul.f32 %v88, %v105
    %vm107 = vcmp.eq.f32.partialorder %v88, inf
    %v108 = vsel %vm107, %v88, %v106
    %vm109 = vcmp.eq.f32.partialorder %v88, 0.0
    %v110 = vand.u32 %v88, 2147483648
    %v111 = vsel %vm109, %v110, %v108
    %v112 = vrsqrt.pop %v91
    %v113 = vmul.f32 %v91, %v112
    %vm114 = vcmp.eq.f32.partialorder %v91, inf
    %v115 = vsel %vm114, %v91, %v113
    %vm116 = vcmp.eq.f32.partialorder %v91, 0.0
    %v117 = vand.u32 %v91, 2147483648
    %v118 = vsel %vm116, %v117, %v115
    %v119 = vrsqrt.pop %v94
    %v120 = vmul.f32 %v94, %v119
    %vm121 = vcmp.eq.f32.partialorder %v94, inf
    %v122 = vsel %vm121, %v94, %v120
    %vm123 = vcmp.eq.f32.partialorder %v94, 0.0
    %v124 = vand.u32 %v94, 2147483648
    %v125 = vsel %vm123, %v124, %v122
    %v126 = vrsqrt.pop %v97
    %v127 = vmul.f32 %v97, %v126
    %vm128 = vcmp.eq.f32.partialorder %v97, inf
    %v129 = vsel %vm128, %v97, %v127
    %vm130 = vcmp.eq.f32.partialorder %v97, 0.0
    %v131 = vand.u32 %v97, 2147483648
    %v132 = vsel %vm130, %v131, %v129
    %v137 = vlaneseq
    %v138 = vand.u32 %v137, 127
    %v139 = vlaneseq
    %v140 = vshrl.u32 %v139, 7
    %v141 = vsub.s32 %v138, %v140
    %v142 = vrot.slane %v111, %v141
    %v143 = vadd.s32 %v138, 4294967288
    %v144 = vlaneseq
    %v145 = vshrl.u32 %v144, 7
    %v146 = vsub.s32 %v143, %v145
    %v147 = vrot.slane %v118, %v146
    %vm148 = vcmask 130112
    %v149 = vsel %vm148, %v147, %v142
    %v150 = vlaneseq
    %v151 = vshrl.u32 %v150, 7
    %v152 = vsub.s32 %v138, %v151
    %v153 = vrot.slane %v125, %v152
    %v154 = vlaneseq
    %v155 = vshrl.u32 %v154, 7
    %v156 = vsub.s32 %v143, %v155
    %v157 = vrot.slane %v132, %v156
    %v158 = vsel %vm148, %v157, %v153
    %v159 = vsel %vm75, %v158, %v149
    %v161 = vmul.f32 %v104, %v159
    %v162 = vadd.f32 %v161, 1e-16
    %v164 = vlaneseq
    %v165 = vshrl.u32 %v164, 7
    %v166 = vsub.s32 0, %v165
    %v167 = vrot.slane %v162, %v166
    %169 = vbcast.lane.b32.xlu0 %v167, 256
    %v170 = vpop.permute.xlu0 %169
    %s172 = sor.u32 256, 8
    %173 = vbcast.lane.b32.xlu0 %v167, %s172
    %v174 = vpop.permute.xlu0 %173
    %v175 = vlaneseq
    %v176 = vshrl.u32 %v175, 7
    %v177 = vsub.s32 1, %v176
    %v178 = vrot.slane %v162, %v177
    %180 = vbcast.lane.b32.xlu0 %v178, 256
    %v181 = vpop.permute.xlu0 %180
    %s183 = sor.u32 256, 8
    %184 = vbcast.lane.b32.xlu0 %v178, %s183
    %v185 = vpop.permute.xlu0 %184
    %v190 = vrcp.pop %v170
    %v191 = vmul.f32 %v60, %v190
    %v192 = vrcp.pop %v174
    %v193 = vmul.f32 %v63, %v192
    %v194 = vrcp.pop %v181
    %v195 = vmul.f32 %v66, %v194
    %v196 = vrcp.pop %v185
    %v197 = vmul.f32 %v69, %v196
    %199 = vset.pattern.permute.xlu0 0
    %200 = vperm.xlu0 %199, %v37
    %v201 = vpop.permute.xlu0 %200
    %v203 = vlaneseq
    %v204 = vshrl.u32 %v203, 7
    %v205 = vsub.s32 0, %v204
    %v206 = vrot.slane %v201, %v205
    %208 = vset.pattern.permute.xlu0 0
    %209 = vperm.xlu0 %208, %v38
    %v210 = vpop.permute.xlu0 %209
    %v212 = vlaneseq
    %v213 = vshrl.u32 %v212, 7
    %v214 = vsub.s32 0, %v213
    %v215 = vrot.slane %v210, %v214
    %v220 = vcombine.high %v191, %v191
    %v222 = vunpack.c.l.s4 1966171168
    %v223 = vunpack.c.0.s8 %v222
    %v224 = vlaneseq
    %v225 = vshrl.u32 %v224, 7
    %v226 = vsub.s32 %v223, %v225
    %v227 = vrot.slane %v191, %v226
    %v229 = vunpack.c.l.s4 1966171168
    %v230 = vunpack.c.0.s8 %v229
    %v231 = vlaneseq
    %v232 = vshrl.u32 %v231, 7
    %v233 = vsub.s32 %v230, %v232
    %v234 = vrot.slane %v220, %v233
    %v235 = vcombine.high %v227, %v227
    %v236 = vcombine.high %v234, %v234
    %v238 = vunpack.c.l.s4 1966171168
    %v239 = vunpack.c.0.s8 %v238
    %v240 = vlaneseq
    %v241 = vshrl.u32 %v240, 7
    %v242 = vsub.s32 %v239, %v241
    %v243 = vrot.slane %v227, %v242
    %v245 = vunpack.c.l.s4 1966171168
    %v246 = vunpack.c.0.s8 %v245
    %v247 = vlaneseq
    %v248 = vshrl.u32 %v247, 7
    %v249 = vsub.s32 %v246, %v248
    %v250 = vrot.slane %v234, %v249
    %v252 = vunpack.c.l.s4 1966171168
    %v253 = vunpack.c.0.s8 %v252
    %v254 = vlaneseq
    %v255 = vshrl.u32 %v254, 7
    %v256 = vsub.s32 %v253, %v255
    %v257 = vrot.slane %v235, %v256
    %v259 = vunpack.c.l.s4 1966171168
    %v260 = vunpack.c.0.s8 %v259
    %v261 = vlaneseq
    %v262 = vshrl.u32 %v261, 7
    %v263 = vsub.s32 %v260, %v262
    %v264 = vrot.slane %v236, %v263
    %v265 = vcombine.high %v243, %v243
    %v266 = vcombine.high %v250, %v250
    %v267 = vcombine.high %v257, %v257
    %v268 = vcombine.high %v264, %v264
    %v269 = vcombine.high %v193, %v193
    %v271 = vunpack.c.l.s4 1966171168
    %v272 = vunpack.c.0.s8 %v271
    %v273 = vlaneseq
    %v274 = vshrl.u32 %v273, 7
    %v275 = vsub.s32 %v272, %v274
    %v276 = vrot.slane %v193, %v275
    %v278 = vunpack.c.l.s4 1966171168
    %v279 = vunpack.c.0.s8 %v278
    %v280 = vlaneseq
    %v281 = vshrl.u32 %v280, 7
    %v282 = vsub.s32 %v279, %v281
    %v283 = vrot.slane %v269, %v282
    %v284 = vcombine.high %v276, %v276
    %v285 = vcombine.high %v283, %v283
    %v287 = vunpack.c.l.s4 1966171168
    %v288 = vunpack.c.0.s8 %v287
    %v289 = vlaneseq
    %v290 = vshrl.u32 %v289, 7
    %v291 = vsub.s32 %v288, %v290
    %v292 = vrot.slane %v276, %v291
    %v294 = vunpack.c.l.s4 1966171168
    %v295 = vunpack.c.0.s8 %v294
    %v296 = vlaneseq
    %v297 = vshrl.u32 %v296, 7
    %v298 = vsub.s32 %v295, %v297
    %v299 = vrot.slane %v283, %v298
    %v301 = vunpack.c.l.s4 1966171168
    %v302 = vunpack.c.0.s8 %v301
    %v303 = vlaneseq
    %v304 = vshrl.u32 %v303, 7
    %v305 = vsub.s32 %v302, %v304
    %v306 = vrot.slane %v284, %v305
    %v308 = vunpack.c.l.s4 1966171168
    %v309 = vunpack.c.0.s8 %v308
    %v310 = vlaneseq
    %v311 = vshrl.u32 %v310, 7
    %v312 = vsub.s32 %v309, %v311
    %v313 = vrot.slane %v285, %v312
    %v314 = vcombine.high %v292, %v292
    %v315 = vcombine.high %v299, %v299
    %v316 = vcombine.high %v306, %v306
    %v317 = vcombine.high %v313, %v313
    %v318 = vcombine.high %v195, %v195
    %v320 = vunpack.c.l.s4 1966171168
    %v321 = vunpack.c.0.s8 %v320
    %v322 = vlaneseq
    %v323 = vshrl.u32 %v322, 7
    %v324 = vsub.s32 %v321, %v323
    %v325 = vrot.slane %v195, %v324
    %v327 = vunpack.c.l.s4 1966171168
    %v328 = vunpack.c.0.s8 %v327
    %v329 = vlaneseq
    %v330 = vshrl.u32 %v329, 7
    %v331 = vsub.s32 %v328, %v330
    %v332 = vrot.slane %v318, %v331
    %v333 = vcombine.high %v325, %v325
    %v334 = vcombine.high %v332, %v332
    %v336 = vunpack.c.l.s4 1966171168
    %v337 = vunpack.c.0.s8 %v336
    %v338 = vlaneseq
    %v339 = vshrl.u32 %v338, 7
    %v340 = vsub.s32 %v337, %v339
    %v341 = vrot.slane %v325, %v340
    %v343 = vunpack.c.l.s4 1966171168
    %v344 = vunpack.c.0.s8 %v343
    %v345 = vlaneseq
    %v346 = vshrl.u32 %v345, 7
    %v347 = vsub.s32 %v344, %v346
    %v348 = vrot.slane %v332, %v347
    %v350 = vunpack.c.l.s4 1966171168
    %v351 = vunpack.c.0.s8 %v350
    %v352 = vlaneseq
    %v353 = vshrl.u32 %v352, 7
    %v354 = vsub.s32 %v351, %v353
    %v355 = vrot.slane %v333, %v354
    %v357 = vunpack.c.l.s4 1966171168
    %v358 = vunpack.c.0.s8 %v357
    %v359 = vlaneseq
    %v360 = vshrl.u32 %v359, 7
    %v361 = vsub.s32 %v358, %v360
    %v362 = vrot.slane %v334, %v361
    %v363 = vcombine.high %v341, %v341
    %v364 = vcombine.high %v348, %v348
    %v365 = vcombine.high %v355, %v355
    %v366 = vcombine.high %v362, %v362
    %v367 = vcombine.high %v197, %v197
    %v369 = vunpack.c.l.s4 1966171168
    %v370 = vunpack.c.0.s8 %v369
    %v371 = vlaneseq
    %v372 = vshrl.u32 %v371, 7
    %v373 = vsub.s32 %v370, %v372
    %v374 = vrot.slane %v197, %v373
    %v376 = vunpack.c.l.s4 1966171168
    %v377 = vunpack.c.0.s8 %v376
    %v378 = vlaneseq
    %v379 = vshrl.u32 %v378, 7
    %v380 = vsub.s32 %v377, %v379
    %v381 = vrot.slane %v367, %v380
    %v382 = vcombine.high %v374, %v374
    %v383 = vcombine.high %v381, %v381
    %v385 = vunpack.c.l.s4 1966171168
    %v386 = vunpack.c.0.s8 %v385
    %v387 = vlaneseq
    %v388 = vshrl.u32 %v387, 7
    %v389 = vsub.s32 %v386, %v388
    %v390 = vrot.slane %v374, %v389
    %v392 = vunpack.c.l.s4 1966171168
    %v393 = vunpack.c.0.s8 %v392
    %v394 = vlaneseq
    %v395 = vshrl.u32 %v394, 7
    %v396 = vsub.s32 %v393, %v395
    %v397 = vrot.slane %v381, %v396
    %v399 = vunpack.c.l.s4 1966171168
    %v400 = vunpack.c.0.s8 %v399
    %v401 = vlaneseq
    %v402 = vshrl.u32 %v401, 7
    %v403 = vsub.s32 %v400, %v402
    %v404 = vrot.slane %v382, %v403
    %v406 = vunpack.c.l.s4 1966171168
    %v407 = vunpack.c.0.s8 %v406
    %v408 = vlaneseq
    %v409 = vshrl.u32 %v408, 7
    %v410 = vsub.s32 %v407, %v409
    %v411 = vrot.slane %v383, %v410
    %v412 = vcombine.high %v390, %v390
    %v413 = vcombine.high %v397, %v397
    %v414 = vcombine.high %v404, %v404
    %v415 = vcombine.high %v411, %v411
    %v416 = vcombine.low %v243, %v257
    %v417 = vcombine.low %v265, %v267
    %v418 = vcombine.low %v250, %v264
    %v419 = vcombine.low %v266, %v268
    %v421 = vunpack.c.l.s4 1966171168
    %v422 = vunpack.c.0.s8 %v421
    %v423 = vlaneseq
    %v424 = vshrl.u32 %v423, 7
    %v425 = vsub.s32 %v422, %v424
    %v426 = vrot.slane %v416, %v425
    %v428 = vunpack.c.l.s4 1966171168
    %v429 = vunpack.c.0.s8 %v428
    %v430 = vlaneseq
    %v431 = vshrl.u32 %v430, 7
    %v432 = vsub.s32 %v429, %v431
    %v433 = vrot.slane %v417, %v432
    %v435 = vunpack.c.l.s4 1966171168
    %v436 = vunpack.c.0.s8 %v435
    %v437 = vlaneseq
    %v438 = vshrl.u32 %v437, 7
    %v439 = vsub.s32 %v436, %v438
    %v440 = vrot.slane %v418, %v439
    %v442 = vunpack.c.l.s4 1966171168
    %v443 = vunpack.c.0.s8 %v442
    %v444 = vlaneseq
    %v445 = vshrl.u32 %v444, 7
    %v446 = vsub.s32 %v443, %v445
    %v447 = vrot.slane %v419, %v446
    %v448 = vcombine.low %v426, %v433
    %v449 = vcombine.low %v440, %v447
    %v451 = vunpack.c.l.s4 1966171168
    %v452 = vunpack.c.0.s8 %v451
    %v453 = vlaneseq
    %v454 = vshrl.u32 %v453, 7
    %v455 = vsub.s32 %v452, %v454
    %v456 = vrot.slane %v448, %v455
    %v458 = vunpack.c.l.s4 1966171168
    %v459 = vunpack.c.0.s8 %v458
    %v460 = vlaneseq
    %v461 = vshrl.u32 %v460, 7
    %v462 = vsub.s32 %v459, %v461
    %v463 = vrot.slane %v449, %v462
    %v464 = vcombine.low %v456, %v463
    %v465 = vcombine.low %v292, %v306
    %v466 = vcombine.low %v314, %v316
    %v467 = vcombine.low %v299, %v313
    %v468 = vcombine.low %v315, %v317
    %v470 = vunpack.c.l.s4 1966171168
    %v471 = vunpack.c.0.s8 %v470
    %v472 = vlaneseq
    %v473 = vshrl.u32 %v472, 7
    %v474 = vsub.s32 %v471, %v473
    %v475 = vrot.slane %v465, %v474
    %v477 = vunpack.c.l.s4 1966171168
    %v478 = vunpack.c.0.s8 %v477
    %v479 = vlaneseq
    %v480 = vshrl.u32 %v479, 7
    %v481 = vsub.s32 %v478, %v480
    %v482 = vrot.slane %v466, %v481
    %v484 = vunpack.c.l.s4 1966171168
    %v485 = vunpack.c.0.s8 %v484
    %v486 = vlaneseq
    %v487 = vshrl.u32 %v486, 7
    %v488 = vsub.s32 %v485, %v487
    %v489 = vrot.slane %v467, %v488
    %v491 = vunpack.c.l.s4 1966171168
    %v492 = vunpack.c.0.s8 %v491
    %v493 = vlaneseq
    %v494 = vshrl.u32 %v493, 7
    %v495 = vsub.s32 %v492, %v494
    %v496 = vrot.slane %v468, %v495
    %v497 = vcombine.low %v475, %v482
    %v498 = vcombine.low %v489, %v496
    %v500 = vunpack.c.l.s4 1966171168
    %v501 = vunpack.c.0.s8 %v500
    %v502 = vlaneseq
    %v503 = vshrl.u32 %v502, 7
    %v504 = vsub.s32 %v501, %v503
    %v505 = vrot.slane %v497, %v504
    %v507 = vunpack.c.l.s4 1966171168
    %v508 = vunpack.c.0.s8 %v507
    %v509 = vlaneseq
    %v510 = vshrl.u32 %v509, 7
    %v511 = vsub.s32 %v508, %v510
    %v512 = vrot.slane %v498, %v511
    %v513 = vcombine.low %v505, %v512
    %v514 = vcombine.low %v341, %v355
    %v515 = vcombine.low %v363, %v365
    %v516 = vcombine.low %v348, %v362
    %v517 = vcombine.low %v364, %v366
    %v519 = vunpack.c.l.s4 1966171168
    %v520 = vunpack.c.0.s8 %v519
    %v521 = vlaneseq
    %v522 = vshrl.u32 %v521, 7
    %v523 = vsub.s32 %v520, %v522
    %v524 = vrot.slane %v514, %v523
    %v526 = vunpack.c.l.s4 1966171168
    %v527 = vunpack.c.0.s8 %v526
    %v528 = vlaneseq
    %v529 = vshrl.u32 %v528, 7
    %v530 = vsub.s32 %v527, %v529
    %v531 = vrot.slane %v515, %v530
    %v533 = vunpack.c.l.s4 1966171168
    %v534 = vunpack.c.0.s8 %v533
    %v535 = vlaneseq
    %v536 = vshrl.u32 %v535, 7
    %v537 = vsub.s32 %v534, %v536
    %v538 = vrot.slane %v516, %v537
    %v540 = vunpack.c.l.s4 1966171168
    %v541 = vunpack.c.0.s8 %v540
    %v542 = vlaneseq
    %v543 = vshrl.u32 %v542, 7
    %v544 = vsub.s32 %v541, %v543
    %v545 = vrot.slane %v517, %v544
    %v546 = vcombine.low %v524, %v531
    %v547 = vcombine.low %v538, %v545
    %v549 = vunpack.c.l.s4 1966171168
    %v550 = vunpack.c.0.s8 %v549
    %v551 = vlaneseq
    %v552 = vshrl.u32 %v551, 7
    %v553 = vsub.s32 %v550, %v552
    %v554 = vrot.slane %v546, %v553
    %v556 = vunpack.c.l.s4 1966171168
    %v557 = vunpack.c.0.s8 %v556
    %v558 = vlaneseq
    %v559 = vshrl.u32 %v558, 7
    %v560 = vsub.s32 %v557, %v559
    %v561 = vrot.slane %v547, %v560
    %v562 = vcombine.low %v554, %v561
    %v563 = vcombine.low %v390, %v404
    %v564 = vcombine.low %v412, %v414
    %v565 = vcombine.low %v397, %v411
    %v566 = vcombine.low %v413, %v415
    %v568 = vunpack.c.l.s4 1966171168
    %v569 = vunpack.c.0.s8 %v568
    %v570 = vlaneseq
    %v571 = vshrl.u32 %v570, 7
    %v572 = vsub.s32 %v569, %v571
    %v573 = vrot.slane %v563, %v572
    %v575 = vunpack.c.l.s4 1966171168
    %v576 = vunpack.c.0.s8 %v575
    %v577 = vlaneseq
    %v578 = vshrl.u32 %v577, 7
    %v579 = vsub.s32 %v576, %v578
    %v580 = vrot.slane %v564, %v579
    %v582 = vunpack.c.l.s4 1966171168
    %v583 = vunpack.c.0.s8 %v582
    %v584 = vlaneseq
    %v585 = vshrl.u32 %v584, 7
    %v586 = vsub.s32 %v583, %v585
    %v587 = vrot.slane %v565, %v586
    %v589 = vunpack.c.l.s4 1966171168
    %v590 = vunpack.c.0.s8 %v589
    %v591 = vlaneseq
    %v592 = vshrl.u32 %v591, 7
    %v593 = vsub.s32 %v590, %v592
    %v594 = vrot.slane %v566, %v593
    %v595 = vcombine.low %v573, %v580
    %v596 = vcombine.low %v587, %v594
    %v598 = vunpack.c.l.s4 1966171168
    %v599 = vunpack.c.0.s8 %v598
    %v600 = vlaneseq
    %v601 = vshrl.u32 %v600, 7
    %v602 = vsub.s32 %v599, %v601
    %v603 = vrot.slane %v595, %v602
    %v605 = vunpack.c.l.s4 1966171168
    %v606 = vunpack.c.0.s8 %v605
    %v607 = vlaneseq
    %v608 = vshrl.u32 %v607, 7
    %v609 = vsub.s32 %v606, %v608
    %v610 = vrot.slane %v596, %v609
    %v611 = vcombine.low %v603, %v610
    %612 = vset.pattern.permute.xlu0 0
    %613 = vperm.xlu0 %612, %v464
    %v614 = vpop.permute.xlu0 %613
    %615 = vset.pattern.permute.xlu0 0
    %616 = vperm.xlu0 %615, %v513
    %v617 = vpop.permute.xlu0 %616
    %618 = vset.pattern.permute.xlu0 0
    %619 = vperm.xlu0 %618, %v562
    %v620 = vpop.permute.xlu0 %619
    %621 = vset.pattern.permute.xlu0 0
    %622 = vperm.xlu0 %621, %v611
    %v623 = vpop.permute.xlu0 %622
    %v624 = vlaneseq
    %v625 = vshrl.u32 %v624, 7
    %v626 = vsub.s32 %v138, %v625
    %v627 = vrot.slane %v614, %v626
    %v628 = vlaneseq
    %v629 = vshrl.u32 %v628, 7
    %v630 = vsub.s32 %v143, %v629
    %v631 = vrot.slane %v617, %v630
    %v632 = vsel %vm148, %v631, %v627
    %v633 = vlaneseq
    %v634 = vshrl.u32 %v633, 7
    %v635 = vsub.s32 %v138, %v634
    %v636 = vrot.slane %v620, %v635
    %v637 = vlaneseq
    %v638 = vshrl.u32 %v637, 7
    %v639 = vsub.s32 %v143, %v638
    %v640 = vrot.slane %v623, %v639
    %v641 = vsel %vm148, %v640, %v636
    %v642 = vsel %vm75, %v641, %v632
    %v644 = vunpack.c.l.s4 1966171168
    %v645 = vunpack.c.0.s8 %v644
    %v646 = vlaneseq
    %v647 = vshrl.u32 %v646, 7
    %v648 = vsub.s32 %v645, %v647
    %v649 = vrot.slane %v642, %v648
    %v650 = vcombine.high %v649, %v649
    %v652 = vunpack.c.l.s4 1966171168
    %v653 = vunpack.c.0.s8 %v652
    %v654 = vlaneseq
    %v655 = vshrl.u32 %v654, 7
    %v656 = vsub.s32 %v653, %v655
    %v657 = vrot.slane %v649, %v656
    %v659 = vunpack.c.l.s4 1966171168
    %v660 = vunpack.c.0.s8 %v659
    %v661 = vlaneseq
    %v662 = vshrl.u32 %v661, 7
    %v663 = vsub.s32 %v660, %v662
    %v664 = vrot.slane %v650, %v663
    %v667 = vmul.f32 %v206, %v657
    %v668 = vmul.f32 %v215, %v664
    %v671 = vcombine.low %v667, %v668
    %v673 = vunpack.c.l.s4 1966171168
    %v674 = vunpack.c.0.s8 %v673
    %v675 = vlaneseq
    %v676 = vshrl.u32 %v675, 7
    %v677 = vsub.s32 %v674, %v676
    %v678 = vrot.slane %v671, %v677
    %v680 = vunpack.c.l.s4 1966171168
    %v681 = vunpack.c.0.s8 %v680
    %v682 = vlaneseq
    %v683 = vshrl.u32 %v682, 7
    %v684 = vsub.s32 %v681, %v683
    %v685 = vrot.slane %v678, %v684
    %vm687 = vcmask 123904
    %v688 = vsel %vm687, %v685, -inf
    %689 = vmax.xlane.f32.xlu0 %v688
    %v690 = vpop.xlane.xlu0 %689
    %v692 = vlaneseq
    %v693 = vshrl.u32 %v692, 7
    %v694 = vsub.s32 0, %v693
    %v695 = vrot.slane %v690, %v694
    %v696 = vlaneseq
    %v697 = vshrl.u32 %v696, 7
    %v698 = vsub.s32 1, %v697
    %v699 = vrot.slane %v690, %v698
    %v702 = vsub.f32 %v667, %v695
    %v703 = vsub.f32 %v668, %v699
    %v704 = vmul.f32 %v702, 1.442695
    %v705 = vpow.pop %v704
    %v706 = vmul.f32 %v703, 1.442695
    %v707 = vpow.pop %v706
    %v710 = vcombine.low %v705, %v707
    %v712 = vunpack.c.l.s4 1966171168
    %v713 = vunpack.c.0.s8 %v712
    %v714 = vlaneseq
    %v715 = vshrl.u32 %v714, 7
    %v716 = vsub.s32 %v713, %v715
    %v717 = vrot.slane %v710, %v716
    %v719 = vunpack.c.l.s4 1966171168
    %v720 = vunpack.c.0.s8 %v719
    %v721 = vlaneseq
    %v722 = vshrl.u32 %v721, 7
    %v723 = vsub.s32 %v720, %v722
    %v724 = vrot.slane %v717, %v723
    %v726 = vsel %vm687, %v724, 0.0
    %727 = vadd.xlane.f32.xlu0 %v726
    %v728 = vpop.xlane.xlu0 %727
    %v730 = vlaneseq
    %v731 = vshrl.u32 %v730, 7
    %v732 = vsub.s32 0, %v731
    %v733 = vrot.slane %v728, %v732
    %v734 = vlaneseq
    %v735 = vshrl.u32 %v734, 7
    %v736 = vsub.s32 1, %v735
    %v737 = vrot.slane %v728, %v736
    %v740 = vrcp.pop %v733
    %v741 = vmul.f32 %v705, %v740
    %v742 = vrcp.pop %v737
    %v743 = vmul.f32 %v707, %v742
    %744 = vset.pattern.permute.xlu0 2
    %745 = vperm.xlu0 %744, %v37
    %v746 = vpop.permute.xlu0 %745
    %v748 = vlaneseq
    %v749 = vshrl.u32 %v748, 7
    %v750 = vsub.s32 0, %v749
    %v751 = vrot.slane %v746, %v750
    %752 = vset.pattern.permute.xlu0 2
    %753 = vperm.xlu0 %752, %v38
    %v754 = vpop.permute.xlu0 %753
    %v756 = vlaneseq
    %v757 = vshrl.u32 %v756, 7
    %v758 = vsub.s32 0, %v757
    %v759 = vrot.slane %v754, %v758
    %v760 = vmul.f32 %v751, %v39
    %v761 = vmul.f32 %v759, %v40
    %v762 = vsub.f32 1.0, %v37
    %v763 = vsub.f32 1.0, %v38
    %765 = vset.pattern.permute.xlu0 2
    %766 = vperm.xlu0 %765, %v762
    %v767 = vpop.permute.xlu0 %766
    %v769 = vlaneseq
    %v770 = vshrl.u32 %v769, 7
    %v771 = vsub.s32 0, %v770
    %v772 = vrot.slane %v767, %v771
    %774 = vset.pattern.permute.xlu0 2
    %775 = vperm.xlu0 %774, %v763
    %v776 = vpop.permute.xlu0 %775
    %v778 = vlaneseq
    %v779 = vshrl.u32 %v778, 7
    %v780 = vsub.s32 0, %v779
    %v781 = vrot.slane %v776, %v780
    %v782 = vmul.f32 %v772, %v741
    %v783 = vmul.f32 %v781, %v743
    %v784 = vadd.f32 %v760, %v782
    %v785 = vadd.f32 %v761, %v783
    %786 = vset.pattern.permute.xlu0 1
    %787 = vperm.xlu0 %786, %v37
    %v788 = vpop.permute.xlu0 %787
    %v790 = vlaneseq
    %v791 = vshrl.u32 %v790, 7
    %v792 = vsub.s32 0, %v791
    %v793 = vrot.slane %v788, %v792
    %794 = vset.pattern.permute.xlu0 1
    %795 = vperm.xlu0 %794, %v38
    %v796 = vpop.permute.xlu0 %795
    %v798 = vlaneseq
    %v799 = vshrl.u32 %v798, 7
    %v800 = vsub.s32 0, %v799
    %v801 = vrot.slane %v796, %v800
    %v802 = vmul.f32 %v793, %v784
    %v803 = vmul.f32 %v801, %v785
    %vm804 = vcmask 122880
    %805 = vst.msk [vmem:[#allocation5] sm:$0x1] %vm804, %v802
    %806 = vst.msk [vmem:[#allocation5 + $0x1] sm:$0x1] %vm804, %v803
    %v809 = vcombine.low %v802, %v803
    %v811 = vunpack.c.l.s4 1966171168
    %v812 = vunpack.c.0.s8 %v811
    %v813 = vlaneseq
    %v814 = vshrl.u32 %v813, 7
    %v815 = vsub.s32 %v812, %v814
    %v816 = vrot.slane %v809, %v815
    %v818 = vunpack.c.l.s4 1966171168
    %v819 = vunpack.c.0.s8 %v818
    %v820 = vlaneseq
    %v821 = vshrl.u32 %v820, 7
    %v822 = vsub.s32 %v819, %v821
    %v823 = vrot.slane %v816, %v822
    %v825 = vlaneseq
    %v826 = vshrl.u32 %v825, 7
    %v827 = vsub.s32 0, %v826
    %v828 = vrot.slane %v823, %v827
    %830 = vbcast.lane.b32.xlu0 %v828, 256
    %v831 = vpop.permute.xlu0 %830
    %s833 = sor.u32 256, 8
    %834 = vbcast.lane.b32.xlu0 %v828, %s833
    %v835 = vpop.permute.xlu0 %834
    %v836 = vlaneseq
    %v837 = vshrl.u32 %v836, 7
    %v838 = vsub.s32 1, %v837
    %v839 = vrot.slane %v823, %v838
    %841 = vbcast.lane.b32.xlu0 %v839, 256
    %v842 = vpop.permute.xlu0 %841
    %s844 = sor.u32 256, 8
    %845 = vbcast.lane.b32.xlu0 %v839, %s844
    %v846 = vpop.permute.xlu0 %845
    %v847 = vlaneseq
    %v848 = vshrl.u32 %v847, 7
    %v849 = vsub.s32 2, %v848
    %v850 = vrot.slane %v35, %v849
    %v851 = vlaneseq
    %v852 = vshrl.u32 %v851, 7
    %v853 = vsub.s32 2, %v852
    %v854 = vrot.slane %v36, %v853
    %v855 = vmul.f32 %v831, %v850
    %v856 = vmul.f32 %v835, %v850
    %v857 = vmul.f32 %v842, %v854
    %v858 = vmul.f32 %v846, %v854
    %v859 = vsub.f32 1.0, %v855
    %v860 = vsub.f32 1.0, %v856
    %v861 = vsub.f32 1.0, %v857
    %v862 = vsub.f32 1.0, %v858
    %v863 = vmul.f32 %v41, %v859
    %v864 = vmul.f32 %v42, %v860
    %v865 = vmul.f32 %v43, %v861
    %v866 = vmul.f32 %v44, %v862
    %v867 = vlaneseq
    %v868 = vshrl.u32 %v867, 7
    %v869 = vsub.s32 1, %v868
    %v870 = vrot.slane %v35, %v869
    %v871 = vlaneseq
    %v872 = vshrl.u32 %v871, 7
    %v873 = vsub.s32 1, %v872
    %v874 = vrot.slane %v36, %v873
    %v875 = vmul.f32 %v831, %v870
    %v876 = vmul.f32 %v835, %v870
    %v877 = vmul.f32 %v842, %v874
    %v878 = vmul.f32 %v846, %v874
    %v879 = vadd.f32 %v863, %v875
    %v880 = vadd.f32 %v864, %v876
    %v881 = vadd.f32 %v865, %v877
    %v882 = vadd.f32 %v866, %v878
    %883 = vst.msk [vmem:[#allocation6] sm:$0xff] %vm57, %v879
    %884 = vst.msk [vmem:[#allocation6 + $0x8] sm:$0xff] %vm57, %v880
    %885 = vst.msk [vmem:[#allocation6 + $0x10] sm:$0xff] %vm57, %v881
    %886 = vst.msk [vmem:[#allocation6 + $0x18] sm:$0xff] %vm57, %v882
    // Predicated region
    $region22: #{tpu_custom_call.1} parent=1 // pred_check
      _
    $region23: #{tpu_custom_call.1} parent=1 // pred_check_branch
      %888 = sbr.rel (0) target = $region25
    $region24: #{tpu_custom_call.1} parent=1 // pred_region
      %s890 = ssub.s32 32, 32
      %891 = vsyncadd [#allocation4], %s890
      %s892 = sshll.u32 [#allocation5], 4
      %s893 = int_to_ptr.vmem [resolvable:$true] %s892
      %898 = dma.vmem_to_hbm [thread:$0]  %s893, 32, %s4, [#allocation4], 16, 16, 1
    $region25: #{tpu_custom_call.1} parent=1 // pred_fallthru
      _
    // Predicated region
    $region26: #{tpu_custom_call.1} parent=1 // pred_check
      _
    $region27: #{tpu_custom_call.1} parent=1 // pred_check_branch
      %900 = sbr.rel (0) target = $region29
    $region28: #{tpu_custom_call.1} parent=1 // pred_region
      %s902 = ssub.s32 512, 512
      %903 = vsyncadd [#allocation7], %s902
      %s904 = sshll.u32 [#allocation6], 4
      %s905 = int_to_ptr.vmem [resolvable:$true] %s904
      %910 = dma.vmem_to_hbm [thread:$0]  %s905, 512, %s5, [#allocation7], 128, 128, 8
    $region29: #{tpu_custom_call.1} parent=1 // pred_fallthru
      _
    // Predicated region
    $region30: #{tpu_custom_call.1} parent=1 // pred_check
      _
    $region31: #{tpu_custom_call.1} parent=1 // pred_check_branch
      %912 = sbr.rel (0) target = $region33
    $region32: #{tpu_custom_call.1} parent=1 // pred_region
      %913 = dma.done [#allocation4], 32
    $region33: #{tpu_custom_call.1} parent=1 // pred_fallthru
      _
    // Predicated region
    $region34: #{tpu_custom_call.1} parent=1 // pred_check
      _
    $region35: #{tpu_custom_call.1} parent=1 // pred_check_branch
      %915 = sbr.rel (0) target = $region37
    $region36: #{tpu_custom_call.1} parent=1 // pred_region
      %916 = dma.done [#allocation7], 512
    $region37: #{tpu_custom_call.1} parent=1 // pred_fallthru
      _
    %917 = vsyncpa [#allocation3], 1
    %918 = vsyncpa [#allocation4], 1
    %919 = vsyncpa [#allocation7], 1

</llo_original>
